<compile_context>
chip_gen: v6e
topology: v6e:2x2x1
jax: 0.10.0
libtpu: 0.0.40
codegen_flags: <defaults>
</compile_context>

<pallas_src>
import jax
import jax.numpy as jnp
from jax import lax
from jax.experimental import pallas as pl
from jax.experimental.pallas import tpu as pltpu

# Small, module-consistent sizes (hard-coded: stride=1, inplanes == planes).
N, C, H, W = 2, 16, 8, 8      # batch, channels, spatial
KH = KW = 3
EPS = 1e-5
WC = W * C                    # 128 -> exactly one lane tile (lane-dense rows)
NH = N * H                    # 16  -> matmul M dimension
K3 = KH * WC                  # 384 -> fused contraction dim (3 kernel rows)


def basic_block_kernel(x_ref, t1_ref, b1_ref, t2_ref, b2_ref, out_ref):
    """Whole BasicBlock in one grid step.

    x_ref      : (N*H, W*C)  f32   lane-dense input rows (row r = image r//H, row r%H)
    t1/t2_ref  : (3*W*C, W*C) bf16 fused block-Toeplitz conv matrices
                                   (rows: [dy=0 | dy=1 | dy=2]), BN scale folded in
    b1/b2_ref  : (1, W*C)    f32   folded BN bias, tiled across W
    out_ref    : (N*H, W*C)  f32
    """
    xf = x_ref[...]                                         # (16, 128) f32

    # Image-boundary masks (zero the rows that have no h-1 / h+1 neighbour).
    rows = lax.broadcasted_iota(jnp.int32, (NH, WC), 0)
    no_up = (rows % H) == 0                                 # image-top rows
    no_dn = (rows % H) == (H - 1)                           # image-bottom rows

    def conv3x3(a, t_ref):
        # Shifted row slabs via XLU sublane rotation + boundary masking
        # (non-negative shifts: NH-1 rotation == shift by -1).
        am = jnp.where(no_up, 0.0, pltpu.roll(a, shift=1, axis=0))       # row h-1
        ap = jnp.where(no_dn, 0.0, pltpu.roll(a, shift=NH - 1, axis=0))  # row h+1
        # Lane-block concat -> (16, 384); single K=384 bf16 MXU matmul with
        # f32 accumulation.
        lhs = jnp.concatenate([am, a, ap], axis=-1).astype(jnp.bfloat16)
        return jnp.dot(lhs, t_ref[...], preferred_element_type=jnp.float32)

    y = jnp.maximum(conv3x3(xf, t1_ref) + b1_ref[...], 0.0)   # conv1 + BN1 + ReLU
    z = conv3x3(y, t2_ref) + b2_ref[...] + xf                 # conv2 + BN2 + skip
    out_ref[...] = jnp.maximum(z, 0.0).astype(out_ref.dtype)


def fold_bn(gamma, beta, running_mean, running_var):
    scale = gamma / jnp.sqrt(running_var + EPS)
    bias = beta - running_mean * scale
    return scale, bias


def prepare_params(w_hwio, scale, bias):
    """One-time ("model load") preprocessing.

    (3,3,C,C) HWIO conv weights + folded BN (scale, bias) ->
      * (3*W*C, W*C) bf16 fused block-Toeplitz RHS with the BN scale folded
        into the output-channel columns:
          T[dy*WC + w_in*C + ci, w_out*C + co] =
              w[dy, w_in - w_out + 1, ci, co] * scale[co]
        for |w_in - w_out| <= 1, else 0 (encodes the width zero-padding).
      * (1, W*C) f32 bias row tiled across W.
    """
    mats = []
    for dy in range(KH):
        acc = jnp.zeros((W, C, W, C), jnp.float32)
        for dx in range(KW):
            off = dx - 1                                   # w_in = w_out + off
            sel = jnp.eye(W, k=-off, dtype=jnp.float32)    # sel[w_in, w_out]
            acc = acc + sel[:, None, :, None] * w_hwio[dy, dx][None, :, None, :]
        mats.append(acc.reshape(WC, WC))
    t = jnp.concatenate(mats, axis=0)                      # (384, 128) f32
    s_tiled = jnp.tile(scale.reshape(1, C), (1, W))        # (1, 128)
    t_scaled = (t * s_tiled).astype(jnp.bfloat16)          # fold BN scale
    b_tiled = jnp.tile(bias.reshape(1, C), (1, W)).astype(jnp.float32)
    return t_scaled, b_tiled


@jax.jit
def basic_block_pallas(x_nchw, t1, b1t, t2, b2t):
    """Per-call path: NCHW in, NCHW out.  Parameters must already be
    preprocessed once with prepare_params()."""
    xf = jnp.transpose(x_nchw, (0, 2, 3, 1)).reshape(NH, WC)   # lane-dense rows

    out = pl.pallas_call(
        basic_block_kernel,
        out_shape=jax.ShapeDtypeStruct((NH, WC), jnp.float32),
        grid_spec=pltpu.PrefetchScalarGridSpec(
            num_scalar_prefetch=0,
            grid=(1,),
            in_specs=[
                pl.BlockSpec((NH, WC), lambda i: (0, 0)),      # x (f32)
                pl.BlockSpec((K3, WC), lambda i: (0, 0)),      # fused T1 (bf16)
                pl.BlockSpec((1, WC), lambda i: (0, 0)),       # bias1 (f32)
                pl.BlockSpec((K3, WC), lambda i: (0, 0)),      # fused T2 (bf16)
                pl.BlockSpec((1, WC), lambda i: (0, 0)),       # bias2 (f32)
            ],
            out_specs=pl.BlockSpec((NH, WC), lambda i: (0, 0)),
        ),
        compiler_params=pltpu.CompilerParams(
            dimension_semantics=("arbitrary",)),
    )(xf, t1, b1t, t2, b2t)

    return jnp.transpose(out.reshape(N, H, W, C), (0, 3, 1, 2))


def basic_block_ref(x_nchw, w1_hwio, s1, b1, w2_hwio, s2, b2):
    """Pure-JAX reference (XLA conv, highest precision, all f32)."""
    x = jnp.transpose(x_nchw, (0, 2, 3, 1))
    y = lax.conv_general_dilated(x, w1_hwio, (1, 1), "SAME",
                                 dimension_numbers=("NHWC", "HWIO", "NHWC"),
                                 precision=lax.Precision.HIGHEST)
    y = jnp.maximum(y * s1 + b1, 0.0)
    z = lax.conv_general_dilated(y, w2_hwio, (1, 1), "SAME",
                                 dimension_numbers=("NHWC", "HWIO", "NHWC"),
                                 precision=lax.Precision.HIGHEST)
    z = jnp.maximum(z * s2 + b2 + x, 0.0)
    return jnp.transpose(z, (0, 3, 1, 2))


if __name__ == "__main__":
    key = jax.random.PRNGKey(0)
    keys = jax.random.split(key, 11)

    # Input (PyTorch NCHW convention).
    x = jax.random.normal(keys[0], (N, C, H, W), dtype=jnp.float32)

    # Deterministic parameter init (shapes follow BasicBlock(inplanes=C, planes=C)).
    w1 = 0.1 * jax.random.normal(keys[1], (KH, KW, C, C), dtype=jnp.float32)  # HWIO
    w2 = 0.1 * jax.random.normal(keys[2], (KH, KW, C, C), dtype=jnp.float32)  # HWIO
    gamma1 = jax.random.uniform(keys[3], (C,), minval=0.5, maxval=1.5)
    beta1 = 0.1 * jax.random.normal(keys[4], (C,))
    mean1 = 0.1 * jax.random.normal(keys[5], (C,))
    var1 = jax.random.uniform(keys[6], (C,), minval=0.5, maxval=1.5)
    gamma2 = jax.random.uniform(keys[7], (C,), minval=0.5, maxval=1.5)
    beta2 = 0.1 * jax.random.normal(keys[8], (C,))
    mean2 = 0.1 * jax.random.normal(keys[9], (C,))
    var2 = jax.random.uniform(keys[10], (C,), minval=0.5, maxval=1.5)

    s1, b1 = fold_bn(gamma1, beta1, mean1, var1)
    s2, b2 = fold_bn(gamma2, beta2, mean2, var2)

    # One-time "model load" preprocessing (hoisted out of the per-call path).
    t1p, b1p = prepare_params(w1, s1, b1)
    t2p, b2p = prepare_params(w2, s2, b2)

    out = basic_block_pallas(x, t1p, b1p, t2p, b2p)
    out = jax.block_until_ready(out)

    ref = basic_block_ref(x, w1, s1, b1, w2, s2, b2)
    assert out.shape == (N, C, H, W)
    # Tolerance relaxed vs. the f32 reference because the MXU operands are now
    # bf16 (accumulation and the elementwise chain remain f32).
    assert jnp.allclose(out, ref, atol=5e-2, rtol=5e-2), "mismatch vs reference"

    print("KERNEL_OK")
</pallas_src>

<mosaic_0001>
module attributes {stable_mosaic.version = 11 : i64} {
  func.func @basic_block_kernel(%arg0: i32, %arg1: memref<16x128xf32, #tpu.memory_space<vmem>>, %arg2: memref<384x128xbf16, #tpu.memory_space<vmem>>, %arg3: memref<1x128xf32, #tpu.memory_space<vmem>>, %arg4: memref<384x128xbf16, #tpu.memory_space<vmem>>, %arg5: memref<1x128xf32, #tpu.memory_space<vmem>>, %arg6: memref<16x128xf32, #tpu.memory_space<vmem>>) attributes {dimension_semantics = [#tpu.dimension_semantics<arbitrary>], iteration_bounds = array<i64: 1>, scalar_prefetch = 0 : i64, scratch_operands = 0 : i64, tpu.core_type = #tpu.core_type<tc>, window_params = [{pipeline_mode = #tpu.pipeline_mode<synchronous>, transform_indices = @transform_0, window_bounds = array<i64: 16, 128>}, {pipeline_mode = #tpu.pipeline_mode<synchronous>, transform_indices = @transform_1, window_bounds = array<i64: 384, 128>}, {pipeline_mode = #tpu.pipeline_mode<synchronous>, transform_indices = @transform_2, window_bounds = array<i64: 1, 128>}, {pipeline_mode = #tpu.pipeline_mode<synchronous>, transform_indices = @transform_3, window_bounds = array<i64: 384, 128>}, {pipeline_mode = #tpu.pipeline_mode<synchronous>, transform_indices = @transform_4, window_bounds = array<i64: 1, 128>}, {pipeline_mode = #tpu.pipeline_mode<synchronous>, transform_indices = @transform_5, window_bounds = array<i64: 16, 128>}]} {
    %c0 = arith.constant 0 : index
    %c0_0 = arith.constant 0 : index
    %0 = vector.load %arg1[%c0, %c0_0] : memref<16x128xf32, #tpu.memory_space<vmem>>, vector<16x128xf32>
    %1 = tpu.iota {dimensions = array<i32: 0>} : vector<16x128xi32>
    %c8_i32 = arith.constant 8 : i32
    %c0_i32 = arith.constant 0 : i32
    %2 = arith.cmpi eq, %c8_i32, %c0_i32 : i32
    %c1_i32 = arith.constant 1 : i32
    %3 = arith.select %2, %c1_i32, %c8_i32 : i32
    %4 = vector.broadcast %3 : i32 to vector<16x128xi32>
    %5 = arith.remsi %1, %4 : vector<16x128xi32>
    %c0_i32_1 = arith.constant 0 : i32
    %6 = vector.broadcast %c0_i32_1 : i32 to vector<16x128xi32>
    %7 = arith.cmpi ne, %5, %6 : vector<16x128xi32>
    %c0_i32_2 = arith.constant 0 : i32
    %8 = vector.broadcast %c0_i32_2 : i32 to vector<16x128xi32>
    %9 = arith.cmpi slt, %5, %8 : vector<16x128xi32>
    %c0_i32_3 = arith.constant 0 : i32
    %10 = arith.cmpi slt, %3, %c0_i32_3 : i32
    %11 = vector.broadcast %10 : i1 to vector<16x128xi1>
    %12 = vector.broadcast %11 : vector<16x128xi1> to vector<16x128xi1>
    %13 = arith.xori %9, %12 : vector<16x128xi1>
    %14 = arith.andi %13, %7 : vector<16x128xi1>
    %15 = vector.broadcast %3 : i32 to vector<16x128xi32>
    %16 = arith.addi %5, %15 : vector<16x128xi32>
    %17 = arith.select %14, %16, %5 : vector<16x128xi1>, vector<16x128xi32>
    %c0_i32_4 = arith.constant 0 : i32
    %18 = vector.broadcast %c0_i32_4 : i32 to vector<16x128xi32>
    %19 = arith.cmpi eq, %17, %18 : vector<16x128xi32>
    %c8_i32_5 = arith.constant 8 : i32
    %c0_i32_6 = arith.constant 0 : i32
    %20 = arith.cmpi eq, %c8_i32_5, %c0_i32_6 : i32
    %c1_i32_7 = arith.constant 1 : i32
    %21 = arith.select %20, %c1_i32_7, %c8_i32_5 : i32
    %22 = vector.broadcast %21 : i32 to vector<16x128xi32>
    %23 = arith.remsi %1, %22 : vector<16x128xi32>
    %c0_i32_8 = arith.constant 0 : i32
    %24 = vector.broadcast %c0_i32_8 : i32 to vector<16x128xi32>
    %25 = arith.cmpi ne, %23, %24 : vector<16x128xi32>
    %c0_i32_9 = arith.constant 0 : i32
    %26 = vector.broadcast %c0_i32_9 : i32 to vector<16x128xi32>
    %27 = arith.cmpi slt, %23, %26 : vector<16x128xi32>
    %c0_i32_10 = arith.constant 0 : i32
    %28 = arith.cmpi slt, %21, %c0_i32_10 : i32
    %29 = vector.broadcast %28 : i1 to vector<16x128xi1>
    %30 = vector.broadcast %29 : vector<16x128xi1> to vector<16x128xi1>
    %31 = arith.xori %27, %30 : vector<16x128xi1>
    %32 = arith.andi %31, %25 : vector<16x128xi1>
    %33 = vector.broadcast %21 : i32 to vector<16x128xi32>
    %34 = arith.addi %23, %33 : vector<16x128xi32>
    %35 = arith.select %32, %34, %23 : vector<16x128xi1>, vector<16x128xi32>
    %c7_i32 = arith.constant 7 : i32
    %36 = vector.broadcast %c7_i32 : i32 to vector<16x128xi32>
    %37 = arith.cmpi eq, %35, %36 : vector<16x128xi32>
    %c1_i32_11 = arith.constant 1 : i32
    %38 = tpu.dynamic_rotate %0 by %c1_i32_11 dim 0 : vector<16x128xf32>, i32 -> vector<16x128xf32>
    %cst = arith.constant 0.000000e+00 : f32
    %39 = vector.broadcast %cst : f32 to vector<16x128xf32>
    %40 = arith.select %19, %39, %38 : vector<16x128xi1>, vector<16x128xf32>
    %c15_i32 = arith.constant 15 : i32
    %41 = tpu.dynamic_rotate %0 by %c15_i32 dim 0 : vector<16x128xf32>, i32 -> vector<16x128xf32>
    %cst_12 = arith.constant 0.000000e+00 : f32
    %42 = vector.broadcast %cst_12 : f32 to vector<16x128xf32>
    %43 = arith.select %37, %42, %41 : vector<16x128xi1>, vector<16x128xf32>
    %44 = tpu.concatenate %40, %0, %43 in 1 : vector<16x128xf32>, vector<16x128xf32>, vector<16x128xf32> -> vector<16x384xf32>
    %45 = arith.truncf %44 : vector<16x384xf32> to vector<16x384xbf16>
    %c0_13 = arith.constant 0 : index
    %c0_14 = arith.constant 0 : index
    %46 = vector.load %arg2[%c0_13, %c0_14] : memref<384x128xbf16, #tpu.memory_space<vmem>>, vector<384x128xbf16>
    %cst_15 = arith.constant dense<0.000000e+00> : vector<16x128xf32>
    %47 = tpu.matmul %45, %46, %cst_15 {dimension_numbers = #tpu.dot_dimension_numbers<[1], [0], [0], [1], [0, 0, 1, 1], [], []>} : vector<16x384xbf16>, vector<384x128xbf16>, vector<16x128xf32> -> vector<16x128xf32>
    %c0_16 = arith.constant 0 : index
    %c0_17 = arith.constant 0 : index
    %48 = vector.load %arg3[%c0_16, %c0_17] : memref<1x128xf32, #tpu.memory_space<vmem>>, vector<1x128xf32>
    %49 = vector.broadcast %48 : vector<1x128xf32> to vector<16x128xf32>
    %50 = arith.addf %47, %49 : vector<16x128xf32>
    %cst_18 = arith.constant 0.000000e+00 : f32
    %51 = vector.broadcast %cst_18 : f32 to vector<16x128xf32>
    %52 = arith.maximumf %50, %51 : vector<16x128xf32>
    %c1_i32_19 = arith.constant 1 : i32
    %53 = tpu.dynamic_rotate %52 by %c1_i32_19 dim 0 : vector<16x128xf32>, i32 -> vector<16x128xf32>
    %cst_20 = arith.constant 0.000000e+00 : f32
    %54 = vector.broadcast %cst_20 : f32 to vector<16x128xf32>
    %55 = arith.select %19, %54, %53 : vector<16x128xi1>, vector<16x128xf32>
    %c15_i32_21 = arith.constant 15 : i32
    %56 = tpu.dynamic_rotate %52 by %c15_i32_21 dim 0 : vector<16x128xf32>, i32 -> vector<16x128xf32>
    %cst_22 = arith.constant 0.000000e+00 : f32
    %57 = vector.broadcast %cst_22 : f32 to vector<16x128xf32>
    %58 = arith.select %37, %57, %56 : vector<16x128xi1>, vector<16x128xf32>
    %59 = tpu.concatenate %55, %52, %58 in 1 : vector<16x128xf32>, vector<16x128xf32>, vector<16x128xf32> -> vector<16x384xf32>
    %60 = arith.truncf %59 : vector<16x384xf32> to vector<16x384xbf16>
    %c0_23 = arith.constant 0 : index
    %c0_24 = arith.constant 0 : index
    %61 = vector.load %arg4[%c0_23, %c0_24] : memref<384x128xbf16, #tpu.memory_space<vmem>>, vector<384x128xbf16>
    %cst_25 = arith.constant dense<0.000000e+00> : vector<16x128xf32>
    %62 = tpu.matmul %60, %61, %cst_25 {dimension_numbers = #tpu.dot_dimension_numbers<[1], [0], [0], [1], [0, 0, 1, 1], [], []>} : vector<16x384xbf16>, vector<384x128xbf16>, vector<16x128xf32> -> vector<16x128xf32>
    %c0_26 = arith.constant 0 : index
    %c0_27 = arith.constant 0 : index
    %63 = vector.load %arg5[%c0_26, %c0_27] : memref<1x128xf32, #tpu.memory_space<vmem>>, vector<1x128xf32>
    %64 = vector.broadcast %63 : vector<1x128xf32> to vector<16x128xf32>
    %65 = arith.addf %62, %64 : vector<16x128xf32>
    %66 = arith.addf %65, %0 : vector<16x128xf32>
    %cst_28 = arith.constant 0.000000e+00 : f32
    %67 = vector.broadcast %cst_28 : f32 to vector<16x128xf32>
    %68 = arith.maximumf %66, %67 : vector<16x128xf32>
    %c0_29 = arith.constant 0 : index
    %c0_30 = arith.constant 0 : index
    %69 = vector.load %arg6[%c0_29, %c0_30] : memref<16x128xf32, #tpu.memory_space<vmem>>, vector<16x128xf32>
    tpu.vector_store %arg6[%c0_29, %c0_30], %68 {strides = array<i32>} : memref<16x128xf32, #tpu.memory_space<vmem>>, vector<16x128xf32>,
    return
  }
  func.func @transform_0(%arg0: i32) -> (i32, i32) {
    %c0_i32 = arith.constant 0 : i32
    %c0_i32_0 = arith.constant 0 : i32
    %c0_i32_1 = arith.constant 0 : i32
    return %c0_i32, %c0_i32_0 : i32, i32
  }
  func.func @transform_1(%arg0: i32) -> (i32, i32) {
    %c0_i32 = arith.constant 0 : i32
    %c0_i32_0 = arith.constant 0 : i32
    %c0_i32_1 = arith.constant 0 : i32
    return %c0_i32, %c0_i32_0 : i32, i32
  }
  func.func @transform_2(%arg0: i32) -> (i32, i32) {
    %c0_i32 = arith.constant 0 : i32
    %c0_i32_0 = arith.constant 0 : i32
    %c0_i32_1 = arith.constant 0 : i32
    return %c0_i32, %c0_i32_0 : i32, i32
  }
  func.func @transform_3(%arg0: i32) -> (i32, i32) {
    %c0_i32 = arith.constant 0 : i32
    %c0_i32_0 = arith.constant 0 : i32
    %c0_i32_1 = arith.constant 0 : i32
    return %c0_i32, %c0_i32_0 : i32, i32
  }
  func.func @transform_4(%arg0: i32) -> (i32, i32) {
    %c0_i32 = arith.constant 0 : i32
    %c0_i32_0 = arith.constant 0 : i32
    %c0_i32_1 = arith.constant 0 : i32
    return %c0_i32, %c0_i32_0 : i32, i32
  }
  func.func @transform_5(%arg0: i32) -> (i32, i32) {
    %c0_i32 = arith.constant 0 : i32
    %c0_i32_0 = arith.constant 0 : i32
    %c0_i32_1 = arith.constant 0 : i32
    return %c0_i32, %c0_i32_0 : i32, i32
  }
}

</mosaic_0001>

<llo_original>
// kernel: basic_block_pallas.1
$region0: #{basic_block_pallas.1}
  #allocation0 [shape = 'u32[]', space=smem, size = 0x4, offset = 0x4, fixed_abs, tag = 'smem constant byte address 0x4 - core index']
  #allocation1 [shape = 'u32[144,128]{1,0:T(1,128)}', space=vmem, size = 0x12000, scoped, tag = 'internal scratch']
  %s0 = inlined_call_operand.vmem [shape: f32[16,128], index: 0, kind: input, shape index: {}]
  %s1 = inlined_call_operand.hbm [shape: bf16[384,128], index: 1, kind: input, shape index: {}]
  %s2 = inlined_call_operand.vmem [shape: f32[1,128], index: 2, kind: input, shape index: {}]
  %s3 = inlined_call_operand.hbm [shape: bf16[384,128], index: 3, kind: input, shape index: {}]
  %s4 = inlined_call_operand.vmem [shape: f32[1,128], index: 4, kind: input, shape index: {}]
  %s5 = inlined_call_operand.vmem [shape: f32[16,128], index: 5, kind: output, shape index: {}]
  %s6 = sld [smem:[#allocation0]]
  $region38: #{basic_block_pallas.1} parent=0
    _
  %s8 = ssub.s32 1, %s6
  %s9 = scalar_select 0, %s8, %s6
  $region1: #{basic_block_pallas.1} parent=0
    #allocation2 [shape = 'u8[98304]{0}', space=vmem, size = 0x18000, scoped, tag = 'input window, operand 1, single buffered']
    #allocation3 [shape = 's32[1]{0}', space=sflag, size = 0x4, scoped, tag = 'scoped memory for basic_block_pallas.1']
    #allocation4 [shape = 'u8[98304]{0}', space=vmem, size = 0x18000, scoped, tag = 'input window, operand 3, single buffered']
    #allocation5 [shape = 's32[1]{0}', space=sflag, size = 0x4, scoped, tag = 'scoped memory for basic_block_pallas.1']
    %10 = vsyncpa [#allocation3], 0
    %11 = vsyncpa [#allocation5], 0
    // Predicated region
    $region2: #{basic_block_pallas.1} parent=1 // pred_check
      _
    $region3: #{basic_block_pallas.1} parent=1 // pred_check_branch
      %13 = sbr.rel (0) target = $region5
    $region4: #{basic_block_pallas.1} parent=1 // pred_region
      _
    $region5: #{basic_block_pallas.1} parent=1 // pred_fallthru
      _
    // Predicated region
    $region6: #{basic_block_pallas.1} parent=1 // pred_check
      _
    $region7: #{basic_block_pallas.1} parent=1 // pred_check_branch
      %15 = sbr.rel (0) target = $region9
    $region8: #{basic_block_pallas.1} parent=1 // pred_region
      %s17 = ssub.s32 3072, 3072
      %18 = vsyncadd [#allocation3], %s17
      %s19 = sshll.u32 [#allocation2], 4
      %s20 = int_to_ptr.vmem [resolvable:$true] %s19
      %25 = dma.hbm_to_vmem [thread:$0]  %s1, 3072, %s20, [#allocation3], 64, 64, 4
    $region9: #{basic_block_pallas.1} parent=1 // pred_fallthru
      _
    // Predicated region
    $region10: #{basic_block_pallas.1} parent=1 // pred_check
      _
    $region11: #{basic_block_pallas.1} parent=1 // pred_check_branch
      %27 = sbr.rel (0) target = $region13
    $region12: #{basic_block_pallas.1} parent=1 // pred_region
      _
    $region13: #{basic_block_pallas.1} parent=1 // pred_fallthru
      _
    // Predicated region
    $region14: #{basic_block_pallas.1} parent=1 // pred_check
      _
    $region15: #{basic_block_pallas.1} parent=1 // pred_check_branch
      %29 = sbr.rel (0) target = $region17
    $region16: #{basic_block_pallas.1} parent=1 // pred_region
      %s31 = ssub.s32 3072, 3072
      %32 = vsyncadd [#allocation5], %s31
      %s33 = sshll.u32 [#allocation4], 4
      %s34 = int_to_ptr.vmem [resolvable:$true] %s33
      %39 = dma.hbm_to_vmem [thread:$0]  %s3, 3072, %s34, [#allocation5], 64, 64, 4
    $region17: #{basic_block_pallas.1} parent=1 // pred_fallthru
      _
    // Predicated region
    $region18: #{basic_block_pallas.1} parent=1 // pred_check
      _
    $region19: #{basic_block_pallas.1} parent=1 // pred_check_branch
      %41 = sbr.rel (0) target = $region21
    $region20: #{basic_block_pallas.1} parent=1 // pred_region
      _
    $region21: #{basic_block_pallas.1} parent=1 // pred_fallthru
      _
    // Predicated region
    $region22: #{basic_block_pallas.1} parent=1 // pred_check
      _
    $region23: #{basic_block_pallas.1} parent=1 // pred_check_branch
      %43 = sbr.rel (0) target = $region25
    $region24: #{basic_block_pallas.1} parent=1 // pred_region
      %44 = dma.done [#allocation3], 3072
    $region25: #{basic_block_pallas.1} parent=1 // pred_fallthru
      _
    // Predicated region
    $region26: #{basic_block_pallas.1} parent=1 // pred_check
      _
    $region27: #{basic_block_pallas.1} parent=1 // pred_check_branch
      %46 = sbr.rel (0) target = $region29
    $region28: #{basic_block_pallas.1} parent=1 // pred_region
      %47 = dma.done [#allocation5], 3072
    $region29: #{basic_block_pallas.1} parent=1 // pred_fallthru
      _
    %v49 = vld [vmem:[%s0] sm:$0xff]
    %v50 = vld [vmem:[%s0 + $0x8] sm:$0xff]
    %v51 = vlaneseq
    %v52 = vshrl.u32 %v51, 7
    %v53 = vadd.s32 %v52, 8
    %vm54 = vcmp.lt.s32.totalorder %v52, 0
    %v55 = vsub.s32 0, %v52
    %v56 = vsel %vm54, %v55, %v52
    %v57 = vshrl.u32 %v56, 3
    %v58 = vand.u32 %v56, 7
    %v59 = vsub.s32 0, %v58
    %v60 = vsel %vm54, %v59, %v58
    %vm61 = vcmp.lt.s32.totalorder %v53, 0
    %v62 = vsub.s32 0, %v53
    %v63 = vsel %vm61, %v62, %v53
    %v64 = vshrl.u32 %v63, 3
    %v65 = vand.u32 %v63, 7
    %v66 = vsub.s32 0, %v65
    %v67 = vsel %vm61, %v66, %v65
    %vm68 = vcmp.ne.s32.totalorder %v60, 0
    %vm69 = vcmp.ne.s32.totalorder %v67, 0
    %vm70 = vcmp.lt.s32.totalorder %v60, 0
    %vm71 = vcmp.lt.s32.totalorder %v67, 0
    %vm72 = vmand %vm70, %vm68
    %vm73 = vmand %vm71, %vm69
    %v74 = vadd.s32 %v60, 8
    %v75 = vadd.s32 %v67, 8
    %v76 = vsel %vm72, %v74, %v60
    %v77 = vsel %vm73, %v75, %v67
    %vm78 = vcmp.eq.s32.totalorder %v76, 0
    %vm79 = vcmp.eq.s32.totalorder %v77, 0
    %vm80 = vcmp.eq.s32.totalorder %v76, 7
    %vm81 = vcmp.eq.s32.totalorder %v77, 7
    %v82 = vrot.slane %v49, 7
    %v83 = vrot.slane %v50, 7
    %vm84 = vcmp.lt.s32.totalorder %v52, 1
    %v85 = vsel %vm84, %v82, %v83
    %v86 = vsel %vm84, %v83, %v82
    %v87 = vsel %vm78, 0.0, %v86
    %v88 = vsel %vm79, 0.0, %v85
    %v89 = vrot.slane %v49, 1
    %v90 = vrot.slane %v50, 1
    %vm91 = vcmp.lt.s32.totalorder %v52, 7
    %v92 = vsel %vm91, %v89, %v90
    %v93 = vsel %vm91, %v90, %v89
    %v94 = vsel %vm80, 0.0, %v92
    %v95 = vsel %vm81, 0.0, %v93
    %v96 = vpack.c.bf16 %v88, %v87
    %v97 = vpack.c.bf16 %v50, %v49
    %v98 = vpack.c.bf16 %v95, %v94
    %v99 = vld [vmem:[#allocation2] sm:$0xf]
    %v100 = vld [vmem:[#allocation2 + $0x4] sm:$0xf]
    %v101 = vld [vmem:[#allocation2 + $0x8] sm:$0xf]
    %v102 = vld [vmem:[#allocation2 + $0xc] sm:$0xf]
    %v103 = vld [vmem:[#allocation2 + $0x10] sm:$0xf]
    %v104 = vld [vmem:[#allocation2 + $0x14] sm:$0xf]
    %v105 = vld [vmem:[#allocation2 + $0x18] sm:$0xf]
    %v106 = vld [vmem:[#allocation2 + $0x1c] sm:$0xf]
    %v107 = vld [vmem:[#allocation2 + $0x20] sm:$0xf]
    %v108 = vld [vmem:[#allocation2 + $0x24] sm:$0xf]
    %v109 = vld [vmem:[#allocation2 + $0x28] sm:$0xf]
    %v110 = vld [vmem:[#allocation2 + $0x2c] sm:$0xf]
    %v111 = vld [vmem:[#allocation2 + $0x30] sm:$0xf]
    %v112 = vld [vmem:[#allocation2 + $0x34] sm:$0xf]
    %v113 = vld [vmem:[#allocation2 + $0x38] sm:$0xf]
    %v114 = vld [vmem:[#allocation2 + $0x3c] sm:$0xf]
    %v115 = vld [vmem:[#allocation2 + $0x40] sm:$0xf]
    %v116 = vld [vmem:[#allocation2 + $0x44] sm:$0xf]
    %v117 = vld [vmem:[#allocation2 + $0x48] sm:$0xf]
    %v118 = vld [vmem:[#allocation2 + $0x4c] sm:$0xf]
    %v119 = vld [vmem:[#allocation2 + $0x50] sm:$0xf]
    %v120 = vld [vmem:[#allocation2 + $0x54] sm:$0xf]
    %v121 = vld [vmem:[#allocation2 + $0x58] sm:$0xf]
    %v122 = vld [vmem:[#allocation2 + $0x5c] sm:$0xf]
    %v123 = vld [vmem:[#allocation2 + $0x60] sm:$0xf]
    %v124 = vld [vmem:[#allocation2 + $0x64] sm:$0xf]
    %v125 = vld [vmem:[#allocation2 + $0x68] sm:$0xf]
    %v126 = vld [vmem:[#allocation2 + $0x6c] sm:$0xf]
    %v127 = vld [vmem:[#allocation2 + $0x70] sm:$0xf]
    %v128 = vld [vmem:[#allocation2 + $0x74] sm:$0xf]
    %v129 = vld [vmem:[#allocation2 + $0x78] sm:$0xf]
    %v130 = vld [vmem:[#allocation2 + $0x7c] sm:$0xf]
    %v131 = vld [vmem:[#allocation2 + $0x80] sm:$0xf]
    %v132 = vld [vmem:[#allocation2 + $0x84] sm:$0xf]
    %v133 = vld [vmem:[#allocation2 + $0x88] sm:$0xf]
    %v134 = vld [vmem:[#allocation2 + $0x8c] sm:$0xf]
    %v135 = vld [vmem:[#allocation2 + $0x90] sm:$0xf]
    %v136 = vld [vmem:[#allocation2 + $0x94] sm:$0xf]
    %v137 = vld [vmem:[#allocation2 + $0x98] sm:$0xf]
    %v138 = vld [vmem:[#allocation2 + $0x9c] sm:$0xf]
    %v139 = vld [vmem:[#allocation2 + $0xa0] sm:$0xf]
    %v140 = vld [vmem:[#allocation2 + $0xa4] sm:$0xf]
    %v141 = vld [vmem:[#allocation2 + $0xa8] sm:$0xf]
    %v142 = vld [vmem:[#allocation2 + $0xac] sm:$0xf]
    %v143 = vld [vmem:[#allocation2 + $0xb0] sm:$0xf]
    %v144 = vld [vmem:[#allocation2 + $0xb4] sm:$0xf]
    %v145 = vld [vmem:[#allocation2 + $0xb8] sm:$0xf]
    %v146 = vld [vmem:[#allocation2 + $0xbc] sm:$0xf]
    %v147 = vld [vmem:[%s2] sm:$0x1]
    %v149 = vlaneseq
    %v150 = vshrl.u32 %v149, 7
    %v151 = vsub.s32 0, %v150
    %v152 = vrot.slane %v147, %v151
    %v202 = vunpack.c.l.b16 %v99
    %v203 = vunpack.c.l.b16 %v100
    %v204 = vunpack.c.l.b16 %v101
    %v205 = vunpack.c.l.b16 %v102
    %v206 = vunpack.c.l.b16 %v103
    %v207 = vunpack.c.l.b16 %v104
    %v208 = vunpack.c.l.b16 %v105
    %v209 = vunpack.c.l.b16 %v106
    %v210 = vunpack.c.l.b16 %v107
    %v211 = vunpack.c.l.b16 %v108
    %v212 = vunpack.c.l.b16 %v109
    %v213 = vunpack.c.l.b16 %v110
    %v214 = vunpack.c.l.b16 %v111
    %v215 = vunpack.c.l.b16 %v112
    %v216 = vunpack.c.l.b16 %v113
    %v217 = vunpack.c.l.b16 %v114
    %v218 = vunpack.c.l.b16 %v115
    %v219 = vunpack.c.l.b16 %v116
    %v220 = vunpack.c.l.b16 %v117
    %v221 = vunpack.c.l.b16 %v118
    %v222 = vunpack.c.l.b16 %v119
    %v223 = vunpack.c.l.b16 %v120
    %v224 = vunpack.c.l.b16 %v121
    %v225 = vunpack.c.l.b16 %v122
    %v226 = vunpack.c.l.b16 %v123
    %v227 = vunpack.c.l.b16 %v124
    %v228 = vunpack.c.l.b16 %v125
    %v229 = vunpack.c.l.b16 %v126
    %v230 = vunpack.c.l.b16 %v127
    %v231 = vunpack.c.l.b16 %v128
    %v232 = vunpack.c.l.b16 %v129
    %v233 = vunpack.c.l.b16 %v130
    %v234 = vunpack.c.l.b16 %v131
    %v235 = vunpack.c.l.b16 %v132
    %v236 = vunpack.c.l.b16 %v133
    %v237 = vunpack.c.l.b16 %v134
    %v238 = vunpack.c.l.b16 %v135
    %v239 = vunpack.c.l.b16 %v136
    %v240 = vunpack.c.l.b16 %v137
    %v241 = vunpack.c.l.b16 %v138
    %v242 = vunpack.c.l.b16 %v139
    %v243 = vunpack.c.l.b16 %v140
    %v244 = vunpack.c.l.b16 %v141
    %v245 = vunpack.c.l.b16 %v142
    %v246 = vunpack.c.l.b16 %v143
    %v247 = vunpack.c.l.b16 %v144
    %v248 = vunpack.c.l.b16 %v145
    %v249 = vunpack.c.l.b16 %v146
    %v250 = vpack.c.b16 %v203, %v202
    %v251 = vpack.c.b16 %v205, %v204
    %v252 = vpack.c.b16 %v207, %v206
    %v253 = vpack.c.b16 %v209, %v208
    %v254 = vpack.c.b16 %v211, %v210
    %v255 = vpack.c.b16 %v213, %v212
    %v256 = vpack.c.b16 %v215, %v214
    %v257 = vpack.c.b16 %v217, %v216
    %v258 = vpack.c.b16 %v219, %v218
    %v259 = vpack.c.b16 %v221, %v220
    %v260 = vpack.c.b16 %v223, %v222
    %v261 = vpack.c.b16 %v225, %v224
    %v262 = vpack.c.b16 %v227, %v226
    %v263 = vpack.c.b16 %v229, %v228
    %v264 = vpack.c.b16 %v231, %v230
    %v265 = vpack.c.b16 %v233, %v232
    %v266 = vpack.c.b16 %v235, %v234
    %v267 = vpack.c.b16 %v237, %v236
    %v268 = vpack.c.b16 %v239, %v238
    %v269 = vpack.c.b16 %v241, %v240
    %v270 = vpack.c.b16 %v243, %v242
    %v271 = vpack.c.b16 %v245, %v244
    %v272 = vpack.c.b16 %v247, %v246
    %v273 = vpack.c.b16 %v249, %v248
    %298 = vmatprep.subr.bf16.mxu0 0
    %299 = vmatpush1.bf16.msra.mxu0 %v257
    %300 = vmatprep.subr.bf16.mxu0 0
    %301 = vmatpush1.bf16.msra.mxu0 %v256
    %302 = vmatprep.subr.bf16.mxu0 0
    %303 = vmatpush1.bf16.msra.mxu0 %v255
    %304 = vmatprep.subr.bf16.mxu0 0
    %305 = vmatpush1.bf16.msra.mxu0 %v254
    %306 = vmatprep.subr.bf16.mxu0 0
    %307 = vmatpush1.bf16.msra.mxu0 %v253
    %308 = vmatprep.subr.bf16.mxu0 0
    %309 = vmatpush1.bf16.msra.mxu0 %v252
    %310 = vmatprep.subr.bf16.mxu0 0
    %311 = vmatpush1.bf16.msra.mxu0 %v251
    %312 = vmatprep.subr.bf16.mxu0 0
    %313 = vmatpush1.bf16.msra.mxu0 %v250
    %314 = vmatprep.subr.bf16.mxu0 0
    %315 = vmatpush2.bf16.msra.mxu0 %v265
    %316 = vmatprep.subr.bf16.mxu0 0
    %317 = vmatpush2.bf16.msra.mxu0 %v264
    %318 = vmatprep.subr.bf16.mxu0 0
    %319 = vmatpush2.bf16.msra.mxu0 %v263
    %320 = vmatprep.subr.bf16.mxu0 0
    %321 = vmatpush2.bf16.msra.mxu0 %v262
    %322 = vmatprep.subr.bf16.mxu0 0
    %323 = vmatpush2.bf16.msra.mxu0 %v261
    %324 = vmatprep.subr.bf16.mxu0 0
    %325 = vmatpush2.bf16.msra.mxu0 %v260
    %326 = vmatprep.subr.bf16.mxu0 0
    %327 = vmatpush2.bf16.msra.mxu0 %v259
    %328 = vmatprep.subr.bf16.mxu0 0
    %329 = vmatpush2.bf16.msra.mxu0 %v258
    %330 = vmatprep.mubr.bf16.mxu0 %v97
    %331 = vmatmul.mubr.bf16.gmra.mxu0 %v96
    %v332 = vpop.f32.mrf.mxu0
    %v333 = vadd.f32 %v152, %v332
    %v334 = vpop.f32.mrf.mxu0
    %v335 = vpop.f32.mrf.mxu0
    %v336 = vadd.f32 %v152, %v335
    %v337 = vpop.f32.mrf.mxu0
    %338 = vdwg.mxu0
    %339 = vmatprep.subr.bf16.mxu0 0
    %340 = vmatpush1.bf16.msra.mxu0 %v273
    %341 = vmatprep.subr.bf16.mxu0 0
    %342 = vmatpush1.bf16.msra.mxu0 %v272
    %343 = vmatprep.subr.bf16.mxu0 0
    %344 = vmatpush1.bf16.msra.mxu0 %v271
    %345 = vmatprep.subr.bf16.mxu0 0
    %346 = vmatpush1.bf16.msra.mxu0 %v270
    %347 = vmatprep.subr.bf16.mxu0 0
    %348 = vmatpush1.bf16.msra.mxu0 %v269
    %349 = vmatprep.subr.bf16.mxu0 0
    %350 = vmatpush1.bf16.msra.mxu0 %v268
    %351 = vmatprep.subr.bf16.mxu0 0
    %352 = vmatpush1.bf16.msra.mxu0 %v267
    %353 = vmatprep.subr.bf16.mxu0 0
    %354 = vmatpush1.bf16.msra.mxu0 %v266
    %355 = vmatprep.subr.bf16.mxu0 0
    %356 = vmatpush2.bf16.msra.mxu0 0
    %357 = vmatprep.subr.bf16.mxu0 0
    %358 = vmatpush2.bf16.msra.mxu0 0
    %359 = vmatprep.subr.bf16.mxu0 0
    %360 = vmatpush2.bf16.msra.mxu0 0
    %361 = vmatprep.subr.bf16.mxu0 0
    %362 = vmatpush2.bf16.msra.mxu0 0
    %363 = vmatprep.subr.bf16.mxu0 0
    %364 = vmatpush2.bf16.msra.mxu0 0
    %365 = vmatprep.subr.bf16.mxu0 0
    %366 = vmatpush2.bf16.msra.mxu0 0
    %367 = vmatprep.subr.bf16.mxu0 0
    %368 = vmatpush2.bf16.msra.mxu0 0
    %369 = vmatprep.subr.bf16.mxu0 0
    %370 = vmatpush2.bf16.msra.mxu0 0
    %371 = vmatprep.mubr.bf16.mxu0 0
    %372 = vmatmul.mubr.bf16.gmra.mxu0 %v98
    %v373 = vpop.f32.mrf.mxu0
    %v374 = vadd.f32 %v333, %v373
    %v375 = vpop.f32.mrf.mxu0
    %v376 = vpop.f32.mrf.mxu0
    %v377 = vadd.f32 %v336, %v376
    %v378 = vpop.f32.mrf.mxu0
    %379 = vdwg.mxu0
    %v380 = vmax.f32 %v374, 0.0
    %v381 = vmax.f32 %v377, 0.0
    %v382 = vrot.slane %v380, 7
    %v383 = vrot.slane %v381, 7
    %v384 = vsel %vm84, %v382, %v383
    %v385 = vsel %vm84, %v383, %v382
    %v386 = vsel %vm78, 0.0, %v385
    %v387 = vsel %vm79, 0.0, %v384
    %v388 = vrot.slane %v380, 1
    %v389 = vrot.slane %v381, 1
    %v390 = vsel %vm91, %v388, %v389
    %v391 = vsel %vm91, %v389, %v388
    %v392 = vsel %vm80, 0.0, %v390
    %v393 = vsel %vm81, 0.0, %v391
    %v394 = vpack.c.bf16 %v387, %v386
    %v395 = vpack.c.bf16 %v381, %v380
    %v396 = vpack.c.bf16 %v393, %v392
    %v397 = vld [vmem:[#allocation4] sm:$0xf]
    %v398 = vld [vmem:[#allocation4 + $0x4] sm:$0xf]
    %v399 = vld [vmem:[#allocation4 + $0x8] sm:$0xf]
    %v400 = vld [vmem:[#allocation4 + $0xc] sm:$0xf]
    %v401 = vld [vmem:[#allocation4 + $0x10] sm:$0xf]
    %v402 = vld [vmem:[#allocation4 + $0x14] sm:$0xf]
    %v403 = vld [vmem:[#allocation4 + $0x18] sm:$0xf]
    %v404 = vld [vmem:[#allocation4 + $0x1c] sm:$0xf]
    %v405 = vld [vmem:[#allocation4 + $0x20] sm:$0xf]
    %v406 = vld [vmem:[#allocation4 + $0x24] sm:$0xf]
    %v407 = vld [vmem:[#allocation4 + $0x28] sm:$0xf]
    %v408 = vld [vmem:[#allocation4 + $0x2c] sm:$0xf]
    %v409 = vld [vmem:[#allocation4 + $0x30] sm:$0xf]
    %v410 = vld [vmem:[#allocation4 + $0x34] sm:$0xf]
    %v411 = vld [vmem:[#allocation4 + $0x38] sm:$0xf]
    %v412 = vld [vmem:[#allocation4 + $0x3c] sm:$0xf]
    %v413 = vld [vmem:[#allocation4 + $0x40] sm:$0xf]
    %v414 = vld [vmem:[#allocation4 + $0x44] sm:$0xf]
    %v415 = vld [vmem:[#allocation4 + $0x48] sm:$0xf]
    %v416 = vld [vmem:[#allocation4 + $0x4c] sm:$0xf]
    %v417 = vld [vmem:[#allocation4 + $0x50] sm:$0xf]
    %v418 = vld [vmem:[#allocation4 + $0x54] sm:$0xf]
    %v419 = vld [vmem:[#allocation4 + $0x58] sm:$0xf]
    %v420 = vld [vmem:[#allocation4 + $0x5c] sm:$0xf]
    %v421 = vld [vmem:[#allocation4 + $0x60] sm:$0xf]
    %v422 = vld [vmem:[#allocation4 + $0x64] sm:$0xf]
    %v423 = vld [vmem:[#allocation4 + $0x68] sm:$0xf]
    %v424 = vld [vmem:[#allocation4 + $0x6c] sm:$0xf]
    %v425 = vld [vmem:[#allocation4 + $0x70] sm:$0xf]
    %v426 = vld [vmem:[#allocation4 + $0x74] sm:$0xf]
    %v427 = vld [vmem:[#allocation4 + $0x78] sm:$0xf]
    %v428 = vld [vmem:[#allocation4 + $0x7c] sm:$0xf]
    %v429 = vld [vmem:[#allocation4 + $0x80] sm:$0xf]
    %v430 = vld [vmem:[#allocation4 + $0x84] sm:$0xf]
    %v431 = vld [vmem:[#allocation4 + $0x88] sm:$0xf]
    %v432 = vld [vmem:[#allocation4 + $0x8c] sm:$0xf]
    %v433 = vld [vmem:[#allocation4 + $0x90] sm:$0xf]
    %v434 = vld [vmem:[#allocation4 + $0x94] sm:$0xf]
    %v435 = vld [vmem:[#allocation4 + $0x98] sm:$0xf]
    %v436 = vld [vmem:[#allocation4 + $0x9c] sm:$0xf]
    %v437 = vld [vmem:[#allocation4 + $0xa0] sm:$0xf]
    %v438 = vld [vmem:[#allocation4 + $0xa4] sm:$0xf]
    %v439 = vld [vmem:[#allocation4 + $0xa8] sm:$0xf]
    %v440 = vld [vmem:[#allocation4 + $0xac] sm:$0xf]
    %v441 = vld [vmem:[#allocation4 + $0xb0] sm:$0xf]
    %v442 = vld [vmem:[#allocation4 + $0xb4] sm:$0xf]
    %v443 = vld [vmem:[#allocation4 + $0xb8] sm:$0xf]
    %v444 = vld [vmem:[#allocation4 + $0xbc] sm:$0xf]
    %v445 = vld [vmem:[%s4] sm:$0x1]
    %v447 = vlaneseq
    %v448 = vshrl.u32 %v447, 7
    %v449 = vsub.s32 0, %v448
    %v450 = vrot.slane %v445, %v449
    %v500 = vunpack.c.l.b16 %v397
    %v501 = vunpack.c.l.b16 %v398
    %v502 = vunpack.c.l.b16 %v399
    %v503 = vunpack.c.l.b16 %v400
    %v504 = vunpack.c.l.b16 %v401
    %v505 = vunpack.c.l.b16 %v402
    %v506 = vunpack.c.l.b16 %v403
    %v507 = vunpack.c.l.b16 %v404
    %v508 = vunpack.c.l.b16 %v405
    %v509 = vunpack.c.l.b16 %v406
    %v510 = vunpack.c.l.b16 %v407
    %v511 = vunpack.c.l.b16 %v408
    %v512 = vunpack.c.l.b16 %v409
    %v513 = vunpack.c.l.b16 %v410
    %v514 = vunpack.c.l.b16 %v411
    %v515 = vunpack.c.l.b16 %v412
    %v516 = vunpack.c.l.b16 %v413
    %v517 = vunpack.c.l.b16 %v414
    %v518 = vunpack.c.l.b16 %v415
    %v519 = vunpack.c.l.b16 %v416
    %v520 = vunpack.c.l.b16 %v417
    %v521 = vunpack.c.l.b16 %v418
    %v522 = vunpack.c.l.b16 %v419
    %v523 = vunpack.c.l.b16 %v420
    %v524 = vunpack.c.l.b16 %v421
    %v525 = vunpack.c.l.b16 %v422
    %v526 = vunpack.c.l.b16 %v423
    %v527 = vunpack.c.l.b16 %v424
    %v528 = vunpack.c.l.b16 %v425
    %v529 = vunpack.c.l.b16 %v426
    %v530 = vunpack.c.l.b16 %v427
    %v531 = vunpack.c.l.b16 %v428
    %v532 = vunpack.c.l.b16 %v429
    %v533 = vunpack.c.l.b16 %v430
    %v534 = vunpack.c.l.b16 %v431
    %v535 = vunpack.c.l.b16 %v432
    %v536 = vunpack.c.l.b16 %v433
    %v537 = vunpack.c.l.b16 %v434
    %v538 = vunpack.c.l.b16 %v435
    %v539 = vunpack.c.l.b16 %v436
    %v540 = vunpack.c.l.b16 %v437
    %v541 = vunpack.c.l.b16 %v438
    %v542 = vunpack.c.l.b16 %v439
    %v543 = vunpack.c.l.b16 %v440
    %v544 = vunpack.c.l.b16 %v441
    %v545 = vunpack.c.l.b16 %v442
    %v546 = vunpack.c.l.b16 %v443
    %v547 = vunpack.c.l.b16 %v444
    %v548 = vpack.c.b16 %v501, %v500
    %v549 = vpack.c.b16 %v503, %v502
    %v550 = vpack.c.b16 %v505, %v504
    %v551 = vpack.c.b16 %v507, %v506
    %v552 = vpack.c.b16 %v509, %v508
    %v553 = vpack.c.b16 %v511, %v510
    %v554 = vpack.c.b16 %v513, %v512
    %v555 = vpack.c.b16 %v515, %v514
    %v556 = vpack.c.b16 %v517, %v516
    %v557 = vpack.c.b16 %v519, %v518
    %v558 = vpack.c.b16 %v521, %v520
    %v559 = vpack.c.b16 %v523, %v522
    %v560 = vpack.c.b16 %v525, %v524
    %v561 = vpack.c.b16 %v527, %v526
    %v562 = vpack.c.b16 %v529, %v528
    %v563 = vpack.c.b16 %v531, %v530
    %v564 = vpack.c.b16 %v533, %v532
    %v565 = vpack.c.b16 %v535, %v534
    %v566 = vpack.c.b16 %v537, %v536
    %v567 = vpack.c.b16 %v539, %v538
    %v568 = vpack.c.b16 %v541, %v540
    %v569 = vpack.c.b16 %v543, %v542
    %v570 = vpack.c.b16 %v545, %v544
    %v571 = vpack.c.b16 %v547, %v546
    %596 = vmatprep.subr.bf16.mxu0 0
    %597 = vmatpush1.bf16.msra.mxu0 %v555
    %598 = vmatprep.subr.bf16.mxu0 0
    %599 = vmatpush1.bf16.msra.mxu0 %v554
    %600 = vmatprep.subr.bf16.mxu0 0
    %601 = vmatpush1.bf16.msra.mxu0 %v553
    %602 = vmatprep.subr.bf16.mxu0 0
    %603 = vmatpush1.bf16.msra.mxu0 %v552
    %604 = vmatprep.subr.bf16.mxu0 0
    %605 = vmatpush1.bf16.msra.mxu0 %v551
    %606 = vmatprep.subr.bf16.mxu0 0
    %607 = vmatpush1.bf16.msra.mxu0 %v550
    %608 = vmatprep.subr.bf16.mxu0 0
    %609 = vmatpush1.bf16.msra.mxu0 %v549
    %610 = vmatprep.subr.bf16.mxu0 0
    %611 = vmatpush1.bf16.msra.mxu0 %v548
    %612 = vmatprep.subr.bf16.mxu0 0
    %613 = vmatpush2.bf16.msra.mxu0 %v563
    %614 = vmatprep.subr.bf16.mxu0 0
    %615 = vmatpush2.bf16.msra.mxu0 %v562
    %616 = vmatprep.subr.bf16.mxu0 0
    %617 = vmatpush2.bf16.msra.mxu0 %v561
    %618 = vmatprep.subr.bf16.mxu0 0
    %619 = vmatpush2.bf16.msra.mxu0 %v560
    %620 = vmatprep.subr.bf16.mxu0 0
    %621 = vmatpush2.bf16.msra.mxu0 %v559
    %622 = vmatprep.subr.bf16.mxu0 0
    %623 = vmatpush2.bf16.msra.mxu0 %v558
    %624 = vmatprep.subr.bf16.mxu0 0
    %625 = vmatpush2.bf16.msra.mxu0 %v557
    %626 = vmatprep.subr.bf16.mxu0 0
    %627 = vmatpush2.bf16.msra.mxu0 %v556
    %628 = vmatprep.mubr.bf16.mxu0 %v395
    %629 = vmatmul.mubr.bf16.gmra.mxu0 %v394
    %v630 = vpop.f32.mrf.mxu0
    %v631 = vadd.f32 %v450, %v630
    %v632 = vpop.f32.mrf.mxu0
    %v633 = vpop.f32.mrf.mxu0
    %v634 = vadd.f32 %v450, %v633
    %v635 = vpop.f32.mrf.mxu0
    %636 = vdwg.mxu0
    %637 = vmatprep.subr.bf16.mxu0 0
    %638 = vmatpush1.bf16.msra.mxu0 %v571
    %639 = vmatprep.subr.bf16.mxu0 0
    %640 = vmatpush1.bf16.msra.mxu0 %v570
    %641 = vmatprep.subr.bf16.mxu0 0
    %642 = vmatpush1.bf16.msra.mxu0 %v569
    %643 = vmatprep.subr.bf16.mxu0 0
    %644 = vmatpush1.bf16.msra.mxu0 %v568
    %645 = vmatprep.subr.bf16.mxu0 0
    %646 = vmatpush1.bf16.msra.mxu0 %v567
    %647 = vmatprep.subr.bf16.mxu0 0
    %648 = vmatpush1.bf16.msra.mxu0 %v566
    %649 = vmatprep.subr.bf16.mxu0 0
    %650 = vmatpush1.bf16.msra.mxu0 %v565
    %651 = vmatprep.subr.bf16.mxu0 0
    %652 = vmatpush1.bf16.msra.mxu0 %v564
    %653 = vmatprep.subr.bf16.mxu0 0
    %654 = vmatpush2.bf16.msra.mxu0 0
    %655 = vmatprep.subr.bf16.mxu0 0
    %656 = vmatpush2.bf16.msra.mxu0 0
    %657 = vmatprep.subr.bf16.mxu0 0
    %658 = vmatpush2.bf16.msra.mxu0 0
    %659 = vmatprep.subr.bf16.mxu0 0
    %660 = vmatpush2.bf16.msra.mxu0 0
    %661 = vmatprep.subr.bf16.mxu0 0
    %662 = vmatpush2.bf16.msra.mxu0 0
    %663 = vmatprep.subr.bf16.mxu0 0
    %664 = vmatpush2.bf16.msra.mxu0 0
    %665 = vmatprep.subr.bf16.mxu0 0
    %666 = vmatpush2.bf16.msra.mxu0 0
    %667 = vmatprep.subr.bf16.mxu0 0
    %668 = vmatpush2.bf16.msra.mxu0 0
    %669 = vmatprep.mubr.bf16.mxu0 0
    %670 = vmatmul.mubr.bf16.gmra.mxu0 %v396
    %v671 = vpop.f32.mrf.mxu0
    %v672 = vadd.f32 %v631, %v671
    %v673 = vpop.f32.mrf.mxu0
    %v674 = vpop.f32.mrf.mxu0
    %v675 = vadd.f32 %v634, %v674
    %v676 = vpop.f32.mrf.mxu0
    %677 = vdwg.mxu0
    %v678 = vadd.f32 %v672, %v49
    %v679 = vadd.f32 %v675, %v50
    %v680 = vmax.f32 %v678, 0.0
    %v681 = vmax.f32 %v679, 0.0
    %682 = vst [vmem:[%s5] sm:$0xff] %v680
    %683 = vst [vmem:[%s5 + $0x8] sm:$0xff] %v681
    // Predicated region
    $region30: #{basic_block_pallas.1} parent=1 // pred_check
      _
    $region31: #{basic_block_pallas.1} parent=1 // pred_check_branch
      %685 = sbr.rel (0) target = $region33
    $region32: #{basic_block_pallas.1} parent=1 // pred_region
      _
    $region33: #{basic_block_pallas.1} parent=1 // pred_fallthru
      _
    // Predicated region
    $region34: #{basic_block_pallas.1} parent=1 // pred_check
      _
    $region35: #{basic_block_pallas.1} parent=1 // pred_check_branch
      %687 = sbr.rel (0) target = $region37
    $region36: #{basic_block_pallas.1} parent=1 // pred_region
      _
    $region37: #{basic_block_pallas.1} parent=1 // pred_fallthru
      _
    %688 = vsyncpa [#allocation3], 1
    %689 = vsyncpa [#allocation5], 1

</llo_original>
